<compile_context>
chip_gen: v6e
topology: v6e:2x2x1
jax: 0.10.0
libtpu: 0.0.40
codegen_flags: <defaults>
</compile_context>

<pallas_src>
import math

import jax
import jax.numpy as jnp
from jax.experimental import pallas as pl
from jax.experimental.pallas import tpu as pltpu

_LANES = 128
_MAX_TILE_ROWS = 6144             # 6144 x 128 x 4 B = 3 MiB per f32 tile buffer
_MIN_PALLAS_ELEMENTS = 64 * 1024  # below this, plain XLA fusion wins


def _cdiv(a, b):
    return -(-a // b)


def _round_up(x, m):
    return _cdiv(x, m) * m


def _param_projector_kernel(mid_ref, hs_ref, x_ref, o_ref):
    # mid_ref / hs_ref: [row_align, 128] period-p constant maps (f32)
    # x_ref / o_ref:    [tile_rows, 128] in the caller's dtype
    tile_rows, lanes = x_ref.shape
    row_align = mid_ref.shape[0]
    # sigmoid(x) = 0.5 + 0.5*tanh(0.5*x)  (EUP tanh; no overflow, no divide)
    # => lb + (ub-lb)*sigmoid(x) = mid + half_scale * tanh(0.5*x)
    t = jnp.tanh(0.5 * x_ref[...].astype(jnp.float32))
    t3 = t.reshape(tile_rows // row_align, row_align, lanes)
    y = mid_ref[...][None, :, :] + hs_ref[...][None, :, :] * t3
    o_ref[...] = y.reshape(tile_rows, lanes).astype(o_ref.dtype)


def param_projector_ref(pre_params, lb, ub):
    """Pure-JAX reference of the PyTorch forward."""
    return lb + (ub - lb) * jax.nn.sigmoid(pre_params)


def param_projector_forward(pre_params, lb, ub, *, force_pallas=False,
                            max_tile_rows=None):
    """pre_params: [..., P] float, lb/ub: [P] -> same shape/dtype as pre_params."""
    p = pre_params.shape[-1]
    assert lb.shape == (p,) and ub.shape == (p,)

    orig_dtype = jnp.dtype(pre_params.dtype)
    lb32 = lb.astype(jnp.float32)
    half_scale = 0.5 * (ub.astype(jnp.float32) - lb32)   # hoisted constants
    mid = lb32 + half_scale

    total = pre_params.size
    if total == 0:
        return pre_params
    if total < _MIN_PALLAS_ELEMENTS and not force_pallas:
        # Tiny problem: Pallas launch/step overhead dominates; let XLA fuse it.
        sig = jax.nn.sigmoid(pre_params.astype(jnp.float32))
        return (lb32 + 2.0 * half_scale * sig).astype(orig_dtype)

    # Kernel I/O stays in the caller's dtype (halves HBM bytes for bf16).
    if orig_dtype in (jnp.dtype(jnp.bfloat16), jnp.dtype(jnp.float16)):
        io_dtype, sublane = orig_dtype, 16
    elif orig_dtype == jnp.dtype(jnp.float32):
        io_dtype, sublane = orig_dtype, 8
    else:
        io_dtype, sublane = jnp.dtype(jnp.float32), 8   # rare dtypes: compute f32

    # Row alignment keeps the period-p lb/scale pattern identical for every
    # grid block (block starts are multiples of row_align*128, divisible by p).
    row_align = math.lcm(sublane, p)

    x = pre_params if orig_dtype == io_dtype else pre_params.astype(io_dtype)
    flat = x.reshape(-1)

    rows_exact = total // _LANES
    aligned = (total % _LANES == 0) and (rows_exact >= row_align)
    if aligned:
        rows = rows_exact
        x2d = flat.reshape(rows, _LANES)              # zero-copy 2D view
    else:
        # TODO(synk): ragged totals pay one minimal pad-to-128 pass + one
        # output-slice pass; only the 128-aligned path is fully zero-copy.
        rows = _round_up(_cdiv(total, _LANES), row_align)
        x2d = jnp.pad(flat, (0, rows * _LANES - total)).reshape(rows, _LANES)

    # --- Tile selection: pick the tile COUNT first (even for v7x's 2 TCs),
    # then a row_align-multiple tile size; trailing block may be partial. ---
    cap = _MAX_TILE_ROWS if max_tile_rows is None else max_tile_rows
    cap = max(row_align, (cap // row_align) * row_align)
    n_tiles = _cdiv(rows, cap)
    if n_tiles == 1 and rows % row_align != 0 and rows >= 2 * row_align:
        n_tiles = 2              # avoid a nearly-empty ragged trailing block
    if n_tiles > 1 and n_tiles % 2 == 1:
        n_tiles += 1             # even tile count -> balanced across 2 TCs
    tile_rows = _round_up(_cdiv(rows, n_tiles), row_align)
    if tile_rows > rows:
        tile_rows = max(row_align, (rows // row_align) * row_align)
    assert tile_rows % row_align == 0
    grid_rows = _cdiv(rows, tile_rows)

    # Small [row_align, 128] constant maps (period-p pattern), broadcast in-kernel.
    reps = (row_align * _LANES) // p
    mid_map = jnp.tile(mid, reps).reshape(row_align, _LANES)
    hs_map = jnp.tile(half_scale, reps).reshape(row_align, _LANES)

    # VMEM: 2 buffers x (x tile + out tile) + maps + slack; explicit so v5e's
    # 16 MiB default doesn't reject larger tiles, capped for v7x headroom.
    tile_bytes = tile_rows * _LANES * io_dtype.itemsize
    map_bytes = 2 * 2 * row_align * _LANES * 4
    vmem_limit = min(max(4 * tile_bytes + map_bytes + (2 << 20), 4 << 20), 40 << 20)

    out2d = pl.pallas_call(
        _param_projector_kernel,
        out_shape=jax.ShapeDtypeStruct((rows, _LANES), io_dtype),
        grid=(grid_rows,),
        in_specs=[
            pl.BlockSpec((row_align, _LANES), lambda i: (0, 0)),   # mid map (reused)
            pl.BlockSpec((row_align, _LANES), lambda i: (0, 0)),   # half_scale map
            pl.BlockSpec((tile_rows, _LANES), lambda i: (i, 0)),   # x tile
        ],
        out_specs=pl.BlockSpec((tile_rows, _LANES), lambda i: (i, 0)),
        compiler_params=pltpu.CompilerParams(
            dimension_semantics=("parallel",),     # megacore sharding on v7x
            vmem_limit_bytes=vmem_limit,
        ),
    )(mid_map, hs_map, x2d)

    out_flat = out2d.reshape(-1)
    if not aligned:
        out_flat = out_flat[:total]
    out = out_flat.reshape(pre_params.shape)
    if out.dtype != orig_dtype:
        out = out.astype(orig_dtype)
    return out


if __name__ == "__main__":
    key = jax.random.PRNGKey(0)
    k1, k2, k3, k4 = jax.random.split(key, 4)

    # Module buffers: bounds for [mu_minus_alpha, rate_coeff, rate_factor].
    lb = jnp.array([0.0, 0.1, 1.0], dtype=jnp.float32)
    ub = jnp.array([1.0, 5.0, 10.0], dtype=jnp.float32)

    # 1) Tiny [8, 3]: ragged total -> minimal-pad path, single tile (forced).
    x1 = jax.random.normal(k1, (8, 3), dtype=jnp.float32)
    o1 = jax.block_until_ready(param_projector_forward(x1, lb, ub, force_pallas=True))
    assert o1.shape == x1.shape and o1.dtype == x1.dtype
    assert jnp.allclose(o1, param_projector_ref(x1, lb, ub), atol=1e-5, rtol=1e-5)

    # 2) [4096, 3]: total = 12288 is a multiple of 128 -> zero-copy aligned path;
    #    small tile cap forces a multi-tile grid (constant-map reuse across steps).
    x2 = jax.random.normal(k2, (4096, 3), dtype=jnp.float32)
    o2 = jax.block_until_ready(
        param_projector_forward(x2, lb, ub, force_pallas=True, max_tile_rows=24))
    assert jnp.allclose(o2, param_projector_ref(x2, lb, ub), atol=1e-5, rtol=1e-5)

    # 3) bf16 I/O in the caller dtype (looser tolerance for the bf16 rounding).
    x3 = jax.random.normal(k3, (2048, 3), dtype=jnp.float32).astype(jnp.bfloat16)
    o3 = jax.block_until_ready(param_projector_forward(x3, lb, ub, force_pallas=True))
    assert o3.dtype == jnp.bfloat16
    ref3 = param_projector_ref(x3.astype(jnp.float32), lb, ub)
    assert jnp.allclose(o3.astype(jnp.float32), ref3, atol=0.08, rtol=0.05)

    # 4) Larger natural path [100000, 3] (ragged total -> pad+slice fallback).
    x4 = jax.random.normal(k4, (100_000, 3), dtype=jnp.float32)
    o4 = jax.block_until_ready(param_projector_forward(x4, lb, ub))
    assert jnp.allclose(o4, param_projector_ref(x4, lb, ub), atol=1e-5, rtol=1e-5)

    print("KERNEL_OK")
</pallas_src>

<mosaic_0001>
module attributes {stable_mosaic.version = 11 : i64} {
  func.func @_param_projector_kernel(%arg0: i32, %arg1: memref<24x128xf32, #tpu.memory_space<vmem>>, %arg2: memref<24x128xf32, #tpu.memory_space<vmem>>, %arg3: memref<24x128xf32, #tpu.memory_space<vmem>>, %arg4: memref<24x128xf32, #tpu.memory_space<vmem>>) attributes {dimension_semantics = [#tpu.dimension_semantics<parallel>], iteration_bounds = array<i64: 1>, scalar_prefetch = 0 : i64, scratch_operands = 0 : i64, tpu.core_type = #tpu.core_type<tc>, window_params = [{pipeline_mode = #tpu.pipeline_mode<synchronous>, transform_indices = @transform_0, window_bounds = array<i64: 24, 128>}, {pipeline_mode = #tpu.pipeline_mode<synchronous>, transform_indices = @transform_1, window_bounds = array<i64: 24, 128>}, {transform_indices = @transform_2, window_bounds = array<i64: 24, 128>}, {transform_indices = @transform_3, window_bounds = array<i64: 24, 128>}]} {
    %c0 = arith.constant 0 : index
    %c0_0 = arith.constant 0 : index
    %0 = vector.load %arg3[%c0, %c0_0] : memref<24x128xf32, #tpu.memory_space<vmem>>, vector<24x128xf32>
    %cst = arith.constant 5.000000e-01 : f32
    %1 = vector.broadcast %cst : f32 to vector<24x128xf32>
    %2 = arith.mulf %1, %0 : vector<24x128xf32>
    %3 = math.tanh %2 : vector<24x128xf32>
    %4 = vector.shape_cast %3 : vector<24x128xf32> to vector<1x24x128xf32>
    %c0_1 = arith.constant 0 : index
    %c0_2 = arith.constant 0 : index
    %5 = vector.load %arg1[%c0_1, %c0_2] : memref<24x128xf32, #tpu.memory_space<vmem>>, vector<24x128xf32>
    %6 = vector.shape_cast %5 : vector<24x128xf32> to vector<1x24x128xf32>
    %c0_3 = arith.constant 0 : index
    %c0_4 = arith.constant 0 : index
    %7 = vector.load %arg2[%c0_3, %c0_4] : memref<24x128xf32, #tpu.memory_space<vmem>>, vector<24x128xf32>
    %8 = vector.shape_cast %7 : vector<24x128xf32> to vector<1x24x128xf32>
    %9 = arith.mulf %8, %4 : vector<1x24x128xf32>
    %10 = arith.addf %6, %9 : vector<1x24x128xf32>
    %11 = vector.shape_cast %10 : vector<1x24x128xf32> to vector<24x128xf32>
    %c0_5 = arith.constant 0 : index
    %c0_6 = arith.constant 0 : index
    %12 = vector.load %arg4[%c0_5, %c0_6] : memref<24x128xf32, #tpu.memory_space<vmem>>, vector<24x128xf32>
    tpu.vector_store %arg4[%c0_5, %c0_6], %11 {strides = array<i32>} : memref<24x128xf32, #tpu.memory_space<vmem>>, vector<24x128xf32>,
    return
  }
  func.func @transform_0(%arg0: i32) -> (i32, i32) {
    %c0_i32 = arith.constant 0 : i32
    %c0_i32_0 = arith.constant 0 : i32
    %c0_i32_1 = arith.constant 0 : i32
    return %c0_i32, %c0_i32_0 : i32, i32
  }
  func.func @transform_1(%arg0: i32) -> (i32, i32) {
    %c0_i32 = arith.constant 0 : i32
    %c0_i32_0 = arith.constant 0 : i32
    %c0_i32_1 = arith.constant 0 : i32
    return %c0_i32, %c0_i32_0 : i32, i32
  }
  func.func @transform_2(%arg0: i32) -> (i32, i32) {
    %c0_i32 = arith.constant 0 : i32
    %c0_i32_0 = arith.constant 0 : i32
    return %arg0, %c0_i32 : i32, i32
  }
  func.func @transform_3(%arg0: i32) -> (i32, i32) {
    %c0_i32 = arith.constant 0 : i32
    %c0_i32_0 = arith.constant 0 : i32
    return %arg0, %c0_i32 : i32, i32
  }
}

</mosaic_0001>

<llo_original>
// kernel: tpu_custom_call.1
$region0: #{tpu_custom_call.1}
  #allocation0 [shape = 'u32[]', space=smem, size = 0x4, offset = 0x4, fixed_abs, tag = 'smem constant byte address 0x4 - core index']
  #allocation1 [shape = 'u32[144,128]{1,0:T(1,128)}', space=vmem, size = 0x12000, scoped, tag = 'internal scratch']
  %s0 = inlined_call_operand.hbm [shape: f32[24,128], index: 0, kind: input, shape index: {}]
  %s1 = inlined_call_operand.hbm [shape: f32[24,128], index: 1, kind: input, shape index: {}]
  %s2 = inlined_call_operand.hbm [shape: f32[24,128], index: 2, kind: input, shape index: {}]
  %s3 = inlined_call_operand.hbm [shape: f32[24,128], index: 3, kind: output, shape index: {}]
  %s4 = sld [smem:[#allocation0]]
  $region34: #{tpu_custom_call.1} parent=0
    _
  %s6 = ssub.s32 1, %s4
  %s7 = scalar_select 0, %s6, %s4
  $region1: #{tpu_custom_call.1} parent=0
    #allocation2 [shape = 'u8[12288]{0}', space=vmem, size = 0x3000, scoped, tag = 'input window, operand 0, single buffered']
    #allocation3 [shape = 's32[1]{0}', space=sflag, size = 0x4, scoped, tag = 'scoped memory for tpu_custom_call.1']
    #allocation4 [shape = 's32[1]{0}', space=sflag, size = 0x4, scoped, tag = 'scoped memory for tpu_custom_call.1']
    #allocation5 [shape = 'u8[12288]{0}', space=vmem, size = 0x3000, scoped, tag = 'input window, operand 1, single buffered']
    #allocation6 [shape = 's32[1]{0}', space=sflag, size = 0x4, scoped, tag = 'scoped memory for tpu_custom_call.1']
    #allocation7 [shape = 'u8[12288]{0}', space=vmem, size = 0x3000, scoped, tag = 'input window, operand 2, single buffered']
    #allocation8 [shape = 'u8[12288]{0}', space=vmem, size = 0x3000, scoped, tag = 'output window, operand 0, single buffered']
    %8 = vsyncpa [#allocation3], 0
    %9 = vsyncpa [#allocation6], 0
    %10 = vsyncpa [#allocation4], 0
    // Predicated region
    $region2: #{tpu_custom_call.1} parent=1 // pred_check
      _
    $region3: #{tpu_custom_call.1} parent=1 // pred_check_branch
      %12 = sbr.rel (0) target = $region5
    $region4: #{tpu_custom_call.1} parent=1 // pred_region
      %s14 = ssub.s32 384, 384
      %15 = vsyncadd [#allocation3], %s14
      %s16 = sshll.u32 [#allocation2], 4
      %s17 = int_to_ptr.vmem [resolvable:$true] %s16
      %22 = dma.hbm_to_vmem [thread:$0]  %s0, 384, %s17, [#allocation3], 128, 128, 8
    $region5: #{tpu_custom_call.1} parent=1 // pred_fallthru
      _
    // Predicated region
    $region6: #{tpu_custom_call.1} parent=1 // pred_check
      _
    $region7: #{tpu_custom_call.1} parent=1 // pred_check_branch
      %24 = sbr.rel (0) target = $region9
    $region8: #{tpu_custom_call.1} parent=1 // pred_region
      %s26 = ssub.s32 384, 384
      %27 = vsyncadd [#allocation6], %s26
      %s28 = sshll.u32 [#allocation5], 4
      %s29 = int_to_ptr.vmem [resolvable:$true] %s28
      %34 = dma.hbm_to_vmem [thread:$0]  %s1, 384, %s29, [#allocation6], 128, 128, 8
    $region9: #{tpu_custom_call.1} parent=1 // pred_fallthru
      _
    // Predicated region
    $region10: #{tpu_custom_call.1} parent=1 // pred_check
      _
    $region11: #{tpu_custom_call.1} parent=1 // pred_check_branch
      %36 = sbr.rel (0) target = $region13
    $region12: #{tpu_custom_call.1} parent=1 // pred_region
      %s38 = ssub.s32 384, 384
      %39 = vsyncadd [#allocation6], %s38
      %s40 = sshll.u32 [#allocation7], 4
      %s41 = int_to_ptr.vmem [resolvable:$true] %s40
      %46 = dma.hbm_to_vmem [thread:$0]  %s2, 384, %s41, [#allocation6], 128, 128, 8
    $region13: #{tpu_custom_call.1} parent=1 // pred_fallthru
      _
    // Predicated region
    $region14: #{tpu_custom_call.1} parent=1 // pred_check
      _
    $region15: #{tpu_custom_call.1} parent=1 // pred_check_branch
      %48 = sbr.rel (0) target = $region17
    $region16: #{tpu_custom_call.1} parent=1 // pred_region
      %49 = dma.done [#allocation3], 384
    $region17: #{tpu_custom_call.1} parent=1 // pred_fallthru
      _
    // Predicated region
    $region18: #{tpu_custom_call.1} parent=1 // pred_check
      _
    $region19: #{tpu_custom_call.1} parent=1 // pred_check_branch
      %51 = sbr.rel (0) target = $region21
    $region20: #{tpu_custom_call.1} parent=1 // pred_region
      %52 = dma.done [#allocation6], 384
    $region21: #{tpu_custom_call.1} parent=1 // pred_fallthru
      _
    // Predicated region
    $region22: #{tpu_custom_call.1} parent=1 // pred_check
      _
    $region23: #{tpu_custom_call.1} parent=1 // pred_check_branch
      %54 = sbr.rel (0) target = $region25
    $region24: #{tpu_custom_call.1} parent=1 // pred_region
      %55 = dma.done [#allocation6], 384
    $region25: #{tpu_custom_call.1} parent=1 // pred_fallthru
      _
    %v56 = vld [vmem:[#allocation7] sm:$0xff]
    %v57 = vld [vmem:[#allocation7 + $0x8] sm:$0xff]
    %v58 = vld [vmem:[#allocation7 + $0x10] sm:$0xff]
    %v59 = vmul.f32 %v56, 0.5
    %v60 = vmul.f32 %v57, 0.5
    %v61 = vmul.f32 %v58, 0.5
    %v62 = vtanh.pop %v59
    %v63 = vtanh.pop %v60
    %v64 = vtanh.pop %v61
    %v65 = vld [vmem:[#allocation2] sm:$0xff]
    %v66 = vld [vmem:[#allocation2 + $0x8] sm:$0xff]
    %v67 = vld [vmem:[#allocation2 + $0x10] sm:$0xff]
    %v68 = vld [vmem:[#allocation5] sm:$0xff]
    %v69 = vld [vmem:[#allocation5 + $0x8] sm:$0xff]
    %v70 = vld [vmem:[#allocation5 + $0x10] sm:$0xff]
    %v71 = vmul.f32 %v68, %v62
    %v72 = vmul.f32 %v69, %v63
    %v73 = vmul.f32 %v70, %v64
    %v74 = vadd.f32 %v65, %v71
    %v75 = vadd.f32 %v66, %v72
    %v76 = vadd.f32 %v67, %v73
    %77 = vst [vmem:[#allocation8] sm:$0xff] %v74
    %78 = vst [vmem:[#allocation8 + $0x8] sm:$0xff] %v75
    %79 = vst [vmem:[#allocation8 + $0x10] sm:$0xff] %v76
    // Predicated region
    $region26: #{tpu_custom_call.1} parent=1 // pred_check
      _
    $region27: #{tpu_custom_call.1} parent=1 // pred_check_branch
      %81 = sbr.rel (0) target = $region29
    $region28: #{tpu_custom_call.1} parent=1 // pred_region
      %s83 = ssub.s32 384, 384
      %84 = vsyncadd [#allocation4], %s83
      %s85 = sshll.u32 [#allocation8], 4
      %s86 = int_to_ptr.vmem [resolvable:$true] %s85
      %91 = dma.vmem_to_hbm [thread:$0]  %s86, 384, %s3, [#allocation4], 128, 128, 8
    $region29: #{tpu_custom_call.1} parent=1 // pred_fallthru
      _
    // Predicated region
    $region30: #{tpu_custom_call.1} parent=1 // pred_check
      _
    $region31: #{tpu_custom_call.1} parent=1 // pred_check_branch
      %93 = sbr.rel (0) target = $region33
    $region32: #{tpu_custom_call.1} parent=1 // pred_region
      %94 = dma.done [#allocation4], 384
    $region33: #{tpu_custom_call.1} parent=1 // pred_fallthru
      _
    %95 = vsyncpa [#allocation3], 1
    %96 = vsyncpa [#allocation6], 1
    %97 = vsyncpa [#allocation4], 1

</llo_original>
